<compile_context>
chip_gen: v5e
topology: v5e:2x2
jax: 0.10.0
libtpu: 0.0.40
codegen_flags: <defaults>
</compile_context>

<pallas_src>
import jax
import jax.numpy as jnp
from jax.experimental import pallas as pl
from jax.experimental.pallas import tpu as pltpu


def ensemble_kernel(x_ref, w_ref, b_ref, o_ref):
    # x_ref: (TB, D)   w_ref: (D, 1)   b_ref: (1, 1)   o_ref: (TB, 1)
    preds = jnp.dot(x_ref[...], w_ref[...], preferred_element_type=jnp.float32)
    o_ref[...] = (preds + b_ref[...]).astype(o_ref.dtype)


def _pick_batch_tile(B, D, itemsize):
    # Keep one x tile <= ~8 MiB so Pallas double-buffering (2 bufs) plus the
    # resident weights fit comfortably inside v7x's smaller VMEM (64 MiB
    # physical / 32 MiB default scoped); same choice is safe on v5e/v6e.
    budget_bytes = 8 * 1024 * 1024
    max_rows = max(8, budget_bytes // max(1, D * itemsize))
    tb = min(B, 1024, max_rows)
    if tb < B:
        tb = max(8, (tb // 8) * 8)   # sublane-aligned partial tiles
    return tb


def ensemble_forward(x, w_stack, b_stack):
    """x: (B, D), w_stack: (K, D), b_stack: (K,) -> (B, 1) f32."""
    B, D = x.shape

    # Pre-reduce the ensemble once (O(K*D), outside the kernel).  The 1/K
    # scale and the bias mean are folded in here, so the kernel does no
    # per-element scaling and no lane-axis reduction over K.
    w_mean = jnp.mean(w_stack.astype(jnp.float32), axis=0).reshape(D, 1)
    b_mean = jnp.mean(b_stack.astype(jnp.float32)).reshape(1, 1)
    # Let the kernel consume x in its native dtype (bf16 halves the dominant
    # HBM stream); accumulation stays f32 via preferred_element_type.
    w_mean = w_mean.astype(x.dtype)

    tb = _pick_batch_tile(B, D, x.dtype.itemsize)
    grid = (pl.cdiv(B, tb),)

    return pl.pallas_call(
        ensemble_kernel,
        out_shape=jax.ShapeDtypeStruct((B, 1), jnp.float32),
        grid_spec=pltpu.PrefetchScalarGridSpec(
            num_scalar_prefetch=0,
            grid=grid,
            in_specs=[
                pl.BlockSpec((tb, D), lambda i: (i, 0)),   # stream x batch tiles
                pl.BlockSpec((D, 1), lambda i: (0, 0)),    # w_mean stays resident
                pl.BlockSpec((1, 1), lambda i: (0, 0)),    # b_mean stays resident
            ],
            out_specs=pl.BlockSpec((tb, 1), lambda i: (i, 0)),
        ),
        compiler_params=pltpu.CompilerParams(
            # Batch tiles are independent -> shard across both v7x TensorCores
            # (no-op on single-TC v5e/v6e).
            dimension_semantics=("parallel",),
            vmem_limit_bytes=32 * 1024 * 1024,
        ),
    )(x, w_mean, b_mean)


def ensemble_reference(x, w_stack, b_stack):
    # Pure-JAX reference of the PyTorch Ensemble loop.
    preds = jnp.zeros((x.shape[0], 1), jnp.float32)
    for k in range(w_stack.shape[0]):
        preds = preds + (x.astype(jnp.float32) @ w_stack[k][:, None] + b_stack[k])
    return preds / w_stack.shape[0]


if __name__ == "__main__":
    key = jax.random.PRNGKey(0)
    kx, kw, kb = jax.random.split(key, 3)

    B, D, K = 8, 32, 4  # batch, features, number of models in the ensemble
    x = jax.random.normal(kx, (B, D), dtype=jnp.float32)
    w_stack = jax.random.normal(kw, (K, D), dtype=jnp.float32) * 0.1
    b_stack = jax.random.normal(kb, (K,), dtype=jnp.float32) * 0.1

    out = ensemble_forward(x, w_stack, b_stack)
    out = jax.block_until_ready(out)

    ref = ensemble_reference(x, w_stack, b_stack)
    assert out.shape == (B, 1)
    assert jnp.allclose(out, ref, atol=1e-5, rtol=1e-5)

    print("KERNEL_OK")
</pallas_src>

<mosaic_0001>
module attributes {stable_mosaic.version = 11 : i64} {
  func.func @ensemble_kernel(%arg0: i32, %arg1: memref<8x32xf32, #tpu.memory_space<vmem>>, %arg2: memref<32x1xf32, #tpu.memory_space<vmem>>, %arg3: memref<1x1xf32, #tpu.memory_space<vmem>>, %arg4: memref<8x1xf32, #tpu.memory_space<vmem>>) attributes {dimension_semantics = [#tpu.dimension_semantics<parallel>], iteration_bounds = array<i64: 1>, scalar_prefetch = 0 : i64, scratch_operands = 0 : i64, tpu.core_type = #tpu.core_type<tc>, window_params = [{transform_indices = @transform_0, window_bounds = array<i64: 8, 32>}, {pipeline_mode = #tpu.pipeline_mode<synchronous>, transform_indices = @transform_1, window_bounds = array<i64: 32, 1>}, {pipeline_mode = #tpu.pipeline_mode<synchronous>, transform_indices = @transform_2, window_bounds = array<i64: 1, 1>}, {transform_indices = @transform_3, window_bounds = array<i64: 8, 1>}]} {
    %c0 = arith.constant 0 : index
    %c0_0 = arith.constant 0 : index
    %0 = vector.load %arg1[%c0, %c0_0] : memref<8x32xf32, #tpu.memory_space<vmem>>, vector<8x32xf32>
    %c0_1 = arith.constant 0 : index
    %c0_2 = arith.constant 0 : index
    %1 = vector.load %arg2[%c0_1, %c0_2] : memref<32x1xf32, #tpu.memory_space<vmem>>, vector<32x1xf32>
    %cst = arith.constant dense<0.000000e+00> : vector<8x1xf32>
    %2 = tpu.matmul %0, %1, %cst {dimension_numbers = #tpu.dot_dimension_numbers<[1], [0], [0], [1], [0, 0, 1, 1], [], []>} : vector<8x32xf32>, vector<32x1xf32>, vector<8x1xf32> -> vector<8x1xf32>
    %c0_3 = arith.constant 0 : index
    %c0_4 = arith.constant 0 : index
    %3 = vector.load %arg3[%c0_3, %c0_4] : memref<1x1xf32, #tpu.memory_space<vmem>>, vector<1x1xf32>
    %4 = vector.broadcast %3 : vector<1x1xf32> to vector<8x1xf32>
    %5 = arith.addf %2, %4 : vector<8x1xf32>
    %c0_5 = arith.constant 0 : index
    %c0_6 = arith.constant 0 : index
    %6 = vector.load %arg4[%c0_5, %c0_6] : memref<8x1xf32, #tpu.memory_space<vmem>>, vector<8x1xf32>
    tpu.vector_store %arg4[%c0_5, %c0_6], %5 {strides = array<i32>} : memref<8x1xf32, #tpu.memory_space<vmem>>, vector<8x1xf32>,
    return
  }
  func.func @transform_0(%arg0: i32) -> (i32, i32) {
    %c0_i32 = arith.constant 0 : i32
    %c0_i32_0 = arith.constant 0 : i32
    return %arg0, %c0_i32 : i32, i32
  }
  func.func @transform_1(%arg0: i32) -> (i32, i32) {
    %c0_i32 = arith.constant 0 : i32
    %c0_i32_0 = arith.constant 0 : i32
    %c0_i32_1 = arith.constant 0 : i32
    return %c0_i32, %c0_i32_0 : i32, i32
  }
  func.func @transform_2(%arg0: i32) -> (i32, i32) {
    %c0_i32 = arith.constant 0 : i32
    %c0_i32_0 = arith.constant 0 : i32
    %c0_i32_1 = arith.constant 0 : i32
    return %c0_i32, %c0_i32_0 : i32, i32
  }
  func.func @transform_3(%arg0: i32) -> (i32, i32) {
    %c0_i32 = arith.constant 0 : i32
    %c0_i32_0 = arith.constant 0 : i32
    return %arg0, %c0_i32 : i32, i32
  }
}

</mosaic_0001>

<llo_original>
// kernel: tpu_custom_call.1
$region0: #{tpu_custom_call.1}
  #allocation0 [shape = 'u32[]', space=smem, size = 0x4, offset = 0x4, fixed_abs, tag = 'smem constant byte address 0x4 - core index']
  #allocation1 [shape = 'u32[72,128]{1,0:T(1,128)}', space=vmem, size = 0x9000, scoped, tag = 'internal scratch']
  #allocation2 [shape = 'f32[1,1]{1,0:T(1,128)S(1)}', space=vmem, size = 0x200, scoped, tag = 'scoped memory for tpu_custom_call.1']
  %s0 = inlined_call_operand.vmem [shape: f32[8,32], index: 0, kind: input, shape index: {}]
  %s1 = inlined_call_operand.vmem [shape: f32[32,1], index: 1, kind: input, shape index: {}]
  %s2 = inlined_call_operand.<no memory space> [shape: f32[1,1], index: 2, kind: input, shape index: {}]
  %s3 = inlined_call_operand.vmem [shape: f32[8,1], index: 3, kind: output, shape index: {}]
  %s4 = sld [smem:[#allocation0]]
  $region22: #{tpu_custom_call.1} parent=0
    _
  %s6 = ssub.s32 1, %s4
  %s7 = scalar_select 0, %s6, %s4
  %v8 = vstv %s2
  %9 = vst [vmem:[#allocation2] sm:$0x1] %v8
  // Predicated region
  $region2: #{tpu_custom_call.1} parent=0 // pred_check
    _
  $region3: #{tpu_custom_call.1} parent=0 // pred_check_branch
    %11 = sbr.rel (0) target = $region5
  $region4: #{tpu_custom_call.1} parent=0 // pred_region
    _
  $region5: #{tpu_custom_call.1} parent=0 // pred_fallthru
    _
  // Predicated region
  $region6: #{tpu_custom_call.1} parent=0 // pred_check
    _
  $region7: #{tpu_custom_call.1} parent=0 // pred_check_branch
    %13 = sbr.rel (0) target = $region9
  $region8: #{tpu_custom_call.1} parent=0 // pred_region
    _
  $region9: #{tpu_custom_call.1} parent=0 // pred_fallthru
    _
  // Predicated region
  $region10: #{tpu_custom_call.1} parent=0 // pred_check
    _
  $region11: #{tpu_custom_call.1} parent=0 // pred_check_branch
    %15 = sbr.rel (0) target = $region13
  $region12: #{tpu_custom_call.1} parent=0 // pred_region
    _
  $region13: #{tpu_custom_call.1} parent=0 // pred_fallthru
    _
  %v16 = vld [vmem:[%s0] sm:$0xff]
  %v17 = vld [vmem:[%s1] sm:$0xff]
  %v18 = vld [vmem:[%s1 + $0x8] sm:$0xff]
  %v19 = vld [vmem:[%s1 + $0x10] sm:$0xff]
  %v20 = vld [vmem:[%s1 + $0x18] sm:$0xff]
  %v21 = vld [vmem:[#allocation2] sm:$0x1]
  %v23 = vperm.slane %v21, 0
  %vm25 = vcmask 261120
  %v27 = vsel %vm25, %v16, 0
  %29 = vmatpush.msra.mxu0 0.0
  %30 = vmatpush.msra.mxu0 0.0
  %31 = vmatpush.msra.mxu0 0.0
  %32 = vmatpush.msra.mxu0 0.0
  %33 = vmatpush.msra.mxu0 0.0
  %34 = vmatpush.msra.mxu0 0.0
  %35 = vmatpush.msra.mxu0 0.0
  %36 = vmatpush.msra.mxu0 0.0
  %37 = vmatpush.msra.mxu0 0.0
  %38 = vmatpush.msra.mxu0 0.0
  %39 = vmatpush.msra.mxu0 0.0
  %40 = vmatpush.msra.mxu0 0.0
  %41 = vmatpush.msra.mxu0 %v20
  %42 = vmatpush.msra.mxu0 %v19
  %43 = vmatpush.msra.mxu0 %v18
  %44 = vmatpush.msra.mxu0 %v17
  %45 = vmatmul.f32.gmra.mxu0 %v27
  %v46 = vpop.f32.mrf.mxu0
  %v47 = vadd.f32 %v23, %v46
  %48 = vdwg.mxu0
  %vm49 = vcmask 7168
  %50 = vst.msk [vmem:[%s3] sm:$0xff] %vm49, %v47
  // Predicated region
  $region14: #{tpu_custom_call.1} parent=0 // pred_check
    _
  $region15: #{tpu_custom_call.1} parent=0 // pred_check_branch
    %52 = sbr.rel (0) target = $region17
  $region16: #{tpu_custom_call.1} parent=0 // pred_region
    _
  $region17: #{tpu_custom_call.1} parent=0 // pred_fallthru
    _
  // Predicated region
  $region18: #{tpu_custom_call.1} parent=0 // pred_check
    _
  $region19: #{tpu_custom_call.1} parent=0 // pred_check_branch
    %54 = sbr.rel (0) target = $region21
  $region20: #{tpu_custom_call.1} parent=0 // pred_region
    _
  $region21: #{tpu_custom_call.1} parent=0 // pred_fallthru
    _

</llo_original>
